<compile_context>
chip_gen: v7x
topology: tpu7x:2x2x1
jax: 0.10.0
libtpu: 0.0.40
codegen_flags: <defaults>
</compile_context>

<pallas_src>
import functools

import jax
import jax.numpy as jnp
from jax.experimental import pallas as pl
from jax.experimental.pallas import tpu as pltpu


def _round_up(x, m):
    return ((x + m - 1) // m) * m


def _mlp_kernel(n_layers, use_vpu_first_layer, compute_dtype, precision,
                transposed_output, *refs):
    """Fused MLP; hidden layers run in lane-dense (features, batch) layout.

    refs = (x_ref, W_0, b_0, Wt_1, b_1, ..., Wt_{L-1}, b_{L-1}, out_ref)
      x_ref   : (bt, input_dim)   row tile of query points (bt % 128 == 0)
      W_0     : (d_in0, d_out0)   first-layer weight, original orientation
      b_0     : (1, d_out0)       first-layer bias row (f32)
      Wt_l    : (d_out, d_in)     pre-transposed weight (compute_dtype), l >= 1
      b_l     : (d_out, 1)        bias column (f32), l >= 1
      out_ref : (bt, output_dim)  or (output_dim, bt) when transposed_output
    """
    x_ref = refs[0]
    out_ref = refs[-1]
    p = refs[1:-1]

    bt = x_ref.shape[0]

    # ---- Layer 0 in row (batch-major) orientation -------------------------
    # Avoids transposing the very narrow (bt, input_dim) tile; the result is
    # moved to the lane-dense layout with a single (bt, d_out0) -> (d_out0, bt)
    # transpose below.
    w0_ref, b0_ref = p[0], p[1]
    d_in0, d_out0 = w0_ref.shape
    xb = x_ref[...].astype(jnp.float32)                       # (bt, d_in0)
    if use_vpu_first_layer:
        # Tiny contraction (K = input_dim): a couple of broadcast-FMAs on the
        # VPU (genuine f32) instead of an MXU push/pop for K << 128.
        w0 = w0_ref[...].astype(jnp.float32)
        acc = jnp.broadcast_to(b0_ref[...].astype(jnp.float32), (bt, d_out0))
        for k in range(d_in0):
            acc = acc + xb[:, k:k + 1] * w0[k:k + 1, :]
    else:
        acc = jnp.dot(xb.astype(compute_dtype),
                      w0_ref[...].astype(compute_dtype),
                      preferred_element_type=jnp.float32,
                      precision=precision)
        acc = acc + b0_ref[...].astype(jnp.float32)
    if n_layers > 1:                                          # hidden: Tanh
        acc = jnp.tanh(acc)

    if n_layers == 1:                                         # degenerate MLP
        if transposed_output:
            out_ref[...] = acc.T.astype(out_ref.dtype)
        else:
            out_ref[...] = acc.astype(out_ref.dtype)
        return

    # ---- Remaining layers in lane-dense (features, batch) layout ----------
    # Batch sits on the 128-lane axis, so tanh / bias-add vregs are fully
    # utilized and the MXU sees a wide N dimension.
    h = acc.T                                                 # (d_out0, bt)
    for layer in range(1, n_layers):
        wt_ref = p[2 * layer]                                 # (d_out, d_in)
        b_ref = p[2 * layer + 1]                              # (d_out, 1)
        h = jnp.dot(wt_ref[...].astype(compute_dtype),
                    h.astype(compute_dtype),
                    preferred_element_type=jnp.float32,
                    precision=precision)
        h = h + b_ref[...].astype(jnp.float32)
        if layer < n_layers - 1:                              # hidden: Tanh
            h = jnp.tanh(h)

    if transposed_output:
        out_ref[...] = h.astype(out_ref.dtype)                # (output_dim, bt)
    else:
        # Per-tile transpose back to the module's (N, output_dim) layout —
        # an XLU-slot cost instead of a whole-output HBM round trip.
        out_ref[...] = h.T.astype(out_ref.dtype)              # (bt, output_dim)


def trunk_net_forward(x, params, *, batch_tile=1024,
                      compute_dtype=jnp.bfloat16, precision=None,
                      out_dtype=None, transposed_output=False,
                      single_buffer_weights=None, vmem_limit_bytes=None):
    """TrunkNet MLP forward pass as one fused Pallas TPU kernel.

    x:       (N, input_dim) float32 query points
    params:  list of (W, b) with W: (d_in, d_out), b: (d_out,)

    Fast paths (memory-bound workload — trim HBM bytes first):
      * compute_dtype=bf16 (default): bf16 MXU operands, f32 accumulation.
        For a bit-exact check use compute_dtype=f32, precision=HIGHEST.
      * out_dtype=jnp.bfloat16: halves the dominant output writeback when the
        downstream branch–trunk combine tolerates bf16 trunk features.
      * transposed_output=True: returns the lane-dense (output_dim, N) slab
        (no transposes anywhere) — preferred when feeding the DeepONet
        combine, which contracts over output_dim.
    """
    n, input_dim = x.shape
    n_layers = len(params)
    output_dim = params[-1][0].shape[1]
    if out_dtype is None:
        out_dtype = x.dtype

    # ---- batch tiling ------------------------------------------------------
    n128 = _round_up(n, 128)
    bt = max(128, min(_round_up(batch_tile, 128), n128))
    if n128 >= 256:
        # Guarantee >= 2 grid steps so the 'parallel' axis can shard across
        # v7x's two TensorCores (harmless no-op on single-TC v5e/v6e).
        bt = min(bt, _round_up(n128 // 2, 128))
    grid = (pl.cdiv(n, bt),)

    use_vpu_first_layer = input_dim <= 8

    # ---- parameters --------------------------------------------------------
    # Layer 0 stays in (d_in, d_out) orientation (row-major first layer);
    # later layers are pre-transposed to (d_out, d_in) MXU operands.
    # Biases are f32 (f32 accumulation throughout).
    flat_params = []
    for idx, (w, b) in enumerate(params):
        w = jnp.asarray(w)
        b = jnp.asarray(b)
        if idx == 0:
            w0_dtype = jnp.float32 if use_vpu_first_layer else compute_dtype
            flat_params.append(w.astype(w0_dtype))                   # (d_in, d_out)
            flat_params.append(b.reshape(1, -1).astype(jnp.float32))  # (1, d_out)
        else:
            flat_params.append(w.T.astype(compute_dtype))             # (d_out, d_in)
            flat_params.append(b.reshape(-1, 1).astype(jnp.float32))  # (d_out, 1)

    param_bytes = sum(int(a.size) * a.dtype.itemsize for a in flat_params)
    if single_buffer_weights is None:
        # Weight/bias blocks use a constant block index (VMEM resident across
        # grid steps); single-buffer them once they're big enough for the
        # default double-buffering to matter (wide trunks, v7x's 64 MiB VMEM).
        single_buffer_weights = param_bytes > (2 << 20)
    const_spec_kwargs = (
        dict(pipeline_mode=pl.Buffered(1)) if single_buffer_weights else {})

    # ---- block specs -------------------------------------------------------
    in_specs = [pl.BlockSpec((bt, input_dim), lambda i: (i, 0))]
    for arr in flat_params:
        in_specs.append(
            pl.BlockSpec(arr.shape, lambda i: (0, 0), **const_spec_kwargs))

    if transposed_output:
        out_shape = jax.ShapeDtypeStruct((output_dim, n), out_dtype)
        out_spec = pl.BlockSpec((output_dim, bt), lambda i: (0, i))
    else:
        out_shape = jax.ShapeDtypeStruct((n, output_dim), out_dtype)
        out_spec = pl.BlockSpec((bt, output_dim), lambda i: (i, 0))

    # ---- cost estimate (helps XLA schedule the surrounding graph) ----------
    flops = 2 * n * sum(int(w.shape[0]) * int(w.shape[1]) for w, _ in params)
    transcendentals = n * sum(int(w.shape[1]) for w, _ in params[:-1])
    bytes_accessed = (n * input_dim * x.dtype.itemsize
                      + n * output_dim * jnp.dtype(out_dtype).itemsize
                      + param_bytes)
    cost = pl.CostEstimate(flops=int(flops),
                           transcendentals=int(transcendentals),
                           bytes_accessed=int(bytes_accessed))

    cp_kwargs = dict(dimension_semantics=("parallel",))
    if vmem_limit_bytes is not None:
        cp_kwargs["vmem_limit_bytes"] = vmem_limit_bytes

    kernel = functools.partial(_mlp_kernel, n_layers, use_vpu_first_layer,
                               compute_dtype, precision, transposed_output)

    return pl.pallas_call(
        kernel,
        out_shape=out_shape,
        grid_spec=pltpu.PrefetchScalarGridSpec(
            num_scalar_prefetch=0,
            grid=grid,
            in_specs=in_specs,
            out_specs=out_spec,
        ),
        compiler_params=pltpu.CompilerParams(**cp_kwargs),
        cost_estimate=cost,
    )(x, *flat_params)


def init_linear_params(key, d_in, d_out):
    """PyTorch nn.Linear default init: U(-k, k) with k = 1/sqrt(fan_in)."""
    kw, kb = jax.random.split(key)
    bound = 1.0 / jnp.sqrt(jnp.float32(d_in))
    w = jax.random.uniform(kw, (d_in, d_out), jnp.float32, -bound, bound)
    b = jax.random.uniform(kb, (d_out,), jnp.float32, -bound, bound)
    return w, b


def reference_forward(x, params):
    h = x
    for i, (w, b) in enumerate(params):
        h = jnp.dot(h, w, precision=jax.lax.Precision.HIGHEST) + b
        if i < len(params) - 1:
            h = jnp.tanh(h)
    return h


if __name__ == "__main__":
    # Small TrunkNet: input_dim=2 (e.g. (x, t) coordinates),
    # hidden_dims=[32, 32], output_dim=32, batch of 128 query points.
    input_dim = 2
    hidden_dims = [32, 32]
    output_dim = 32
    batch = 128

    key = jax.random.PRNGKey(0)
    key_x, key_p = jax.random.split(key)

    x = jax.random.normal(key_x, (batch, input_dim), dtype=jnp.float32)

    dims = [input_dim] + hidden_dims + [output_dim]
    layer_keys = jax.random.split(key_p, len(dims) - 1)
    params = [
        init_linear_params(layer_keys[i], dims[i], dims[i + 1])
        for i in range(len(dims) - 1)
    ]

    ref = reference_forward(x, params)

    # 1) Default fast path: bf16 MXU operands, f32 accumulation, f32 out.
    out = jax.block_until_ready(trunk_net_forward(x, params))
    assert out.shape == (batch, output_dim)
    assert jnp.allclose(out, ref, atol=5e-2, rtol=5e-2), "bf16 mismatch vs reference"

    # 2) Exact path: f32 operands + HIGHEST precision — tight check.
    out_f32 = jax.block_until_ready(
        trunk_net_forward(x, params, compute_dtype=jnp.float32,
                          precision=jax.lax.Precision.HIGHEST))
    assert jnp.allclose(out_f32, ref, atol=1e-5, rtol=1e-5), "f32 mismatch vs reference"

    # 3) Ragged batch (not a multiple of the 128-lane tile): exercises the
    #    masked edge blocks (no wrapper pad/slice).
    out_ragged = jax.block_until_ready(
        trunk_net_forward(x[:100], params, compute_dtype=jnp.float32,
                          precision=jax.lax.Precision.HIGHEST))
    assert out_ragged.shape == (100, output_dim)
    assert jnp.allclose(out_ragged, ref[:100], atol=1e-5, rtol=1e-5), \
        "ragged-batch mismatch vs reference"

    # 4) Lane-dense (output_dim, N) slab with bf16 writeback — the DeepONet
    #    combine fast path (no transposes anywhere, half the output bytes).
    out_t = jax.block_until_ready(
        trunk_net_forward(x, params, transposed_output=True,
                          out_dtype=jnp.bfloat16))
    assert out_t.shape == (output_dim, batch)
    assert jnp.allclose(out_t.T.astype(jnp.float32), ref, atol=5e-2, rtol=5e-2), \
        "transposed/bf16-out mismatch vs reference"

    print("KERNEL_OK")
</pallas_src>

<mosaic_0001>
module attributes {stable_mosaic.version = 11 : i64} {
  func.func @_mlp_kernel(%arg0: i32, %arg1: memref<128x2xf32, #tpu.memory_space<vmem>>, %arg2: memref<2x32xf32, #tpu.memory_space<vmem>>, %arg3: memref<1x32xf32, #tpu.memory_space<vmem>>, %arg4: memref<32x32xbf16, #tpu.memory_space<vmem>>, %arg5: memref<32x1xf32, #tpu.memory_space<vmem>>, %arg6: memref<32x32xbf16, #tpu.memory_space<vmem>>, %arg7: memref<32x1xf32, #tpu.memory_space<vmem>>, %arg8: memref<128x32xf32, #tpu.memory_space<vmem>>) attributes {dimension_semantics = [#tpu.dimension_semantics<parallel>], iteration_bounds = array<i64: 1>, scalar_prefetch = 0 : i64, scratch_operands = 0 : i64, tpu.core_type = #tpu.core_type<tc>, window_params = [{transform_indices = @transform_0, window_bounds = array<i64: 128, 2>}, {pipeline_mode = #tpu.pipeline_mode<synchronous>, transform_indices = @transform_1, window_bounds = array<i64: 2, 32>}, {pipeline_mode = #tpu.pipeline_mode<synchronous>, transform_indices = @transform_2, window_bounds = array<i64: 1, 32>}, {pipeline_mode = #tpu.pipeline_mode<synchronous>, transform_indices = @transform_3, window_bounds = array<i64: 32, 32>}, {pipeline_mode = #tpu.pipeline_mode<synchronous>, transform_indices = @transform_4, window_bounds = array<i64: 32, 1>}, {pipeline_mode = #tpu.pipeline_mode<synchronous>, transform_indices = @transform_5, window_bounds = array<i64: 32, 32>}, {pipeline_mode = #tpu.pipeline_mode<synchronous>, transform_indices = @transform_6, window_bounds = array<i64: 32, 1>}, {transform_indices = @transform_7, window_bounds = array<i64: 128, 32>}]} {
    %c0 = arith.constant 0 : index
    %c0_0 = arith.constant 0 : index
    %0 = vector.load %arg1[%c0, %c0_0] : memref<128x2xf32, #tpu.memory_space<vmem>>, vector<128x2xf32>
    %c0_1 = arith.constant 0 : index
    %c0_2 = arith.constant 0 : index
    %1 = vector.load %arg2[%c0_1, %c0_2] : memref<2x32xf32, #tpu.memory_space<vmem>>, vector<2x32xf32>
    %c0_3 = arith.constant 0 : index
    %c0_4 = arith.constant 0 : index
    %2 = vector.load %arg3[%c0_3, %c0_4] : memref<1x32xf32, #tpu.memory_space<vmem>>, vector<1x32xf32>
    %3 = vector.shape_cast %2 : vector<1x32xf32> to vector<1x32xf32>
    %4 = vector.broadcast %3 : vector<1x32xf32> to vector<128x32xf32>
    %5 = vector.extract_strided_slice %0 {offsets = [0, 0], sizes = [128, 1], strides = [1, 1]} : vector<128x2xf32> to vector<128x1xf32>
    %6 = vector.extract_strided_slice %1 {offsets = [0, 0], sizes = [1, 32], strides = [1, 1]} : vector<2x32xf32> to vector<1x32xf32>
    %7 = vector.broadcast %5 : vector<128x1xf32> to vector<128x32xf32>
    %8 = vector.broadcast %6 : vector<1x32xf32> to vector<128x32xf32>
    %9 = arith.mulf %7, %8 : vector<128x32xf32>
    %10 = arith.addf %4, %9 : vector<128x32xf32>
    %11 = vector.extract_strided_slice %0 {offsets = [0, 1], sizes = [128, 1], strides = [1, 1]} : vector<128x2xf32> to vector<128x1xf32>
    %12 = vector.extract_strided_slice %1 {offsets = [1, 0], sizes = [1, 32], strides = [1, 1]} : vector<2x32xf32> to vector<1x32xf32>
    %13 = vector.broadcast %11 : vector<128x1xf32> to vector<128x32xf32>
    %14 = vector.broadcast %12 : vector<1x32xf32> to vector<128x32xf32>
    %15 = arith.mulf %13, %14 : vector<128x32xf32>
    %16 = arith.addf %10, %15 : vector<128x32xf32>
    %17 = math.tanh %16 : vector<128x32xf32>
    %18 = tpu.transpose %17, [1, 0] : vector<128x32xf32> -> vector<32x128xf32>
    %c0_5 = arith.constant 0 : index
    %c0_6 = arith.constant 0 : index
    %19 = vector.load %arg4[%c0_5, %c0_6] : memref<32x32xbf16, #tpu.memory_space<vmem>>, vector<32x32xbf16>
    %20 = arith.truncf %18 : vector<32x128xf32> to vector<32x128xbf16>
    %cst = arith.constant dense<0.000000e+00> : vector<32x128xf32>
    %21 = tpu.matmul %19, %20, %cst {dimension_numbers = #tpu.dot_dimension_numbers<[1], [0], [0], [1], [0, 0, 1, 1], [], []>} : vector<32x32xbf16>, vector<32x128xbf16>, vector<32x128xf32> -> vector<32x128xf32>
    %c0_7 = arith.constant 0 : index
    %c0_8 = arith.constant 0 : index
    %22 = vector.load %arg5[%c0_7, %c0_8] : memref<32x1xf32, #tpu.memory_space<vmem>>, vector<32x1xf32>
    %23 = vector.broadcast %22 : vector<32x1xf32> to vector<32x128xf32>
    %24 = arith.addf %21, %23 : vector<32x128xf32>
    %25 = math.tanh %24 : vector<32x128xf32>
    %c0_9 = arith.constant 0 : index
    %c0_10 = arith.constant 0 : index
    %26 = vector.load %arg6[%c0_9, %c0_10] : memref<32x32xbf16, #tpu.memory_space<vmem>>, vector<32x32xbf16>
    %27 = arith.truncf %25 : vector<32x128xf32> to vector<32x128xbf16>
    %cst_11 = arith.constant dense<0.000000e+00> : vector<32x128xf32>
    %28 = tpu.matmul %26, %27, %cst_11 {dimension_numbers = #tpu.dot_dimension_numbers<[1], [0], [0], [1], [0, 0, 1, 1], [], []>} : vector<32x32xbf16>, vector<32x128xbf16>, vector<32x128xf32> -> vector<32x128xf32>
    %c0_12 = arith.constant 0 : index
    %c0_13 = arith.constant 0 : index
    %29 = vector.load %arg7[%c0_12, %c0_13] : memref<32x1xf32, #tpu.memory_space<vmem>>, vector<32x1xf32>
    %30 = vector.broadcast %29 : vector<32x1xf32> to vector<32x128xf32>
    %31 = arith.addf %28, %30 : vector<32x128xf32>
    %32 = tpu.transpose %31, [1, 0] : vector<32x128xf32> -> vector<128x32xf32>
    %c0_14 = arith.constant 0 : index
    %c0_15 = arith.constant 0 : index
    %33 = vector.load %arg8[%c0_14, %c0_15] : memref<128x32xf32, #tpu.memory_space<vmem>>, vector<128x32xf32>
    tpu.vector_store %arg8[%c0_14, %c0_15], %32 {strides = array<i32>} : memref<128x32xf32, #tpu.memory_space<vmem>>, vector<128x32xf32>,
    return
  }
  func.func @transform_0(%arg0: i32) -> (i32, i32) {
    %c0_i32 = arith.constant 0 : i32
    %c0_i32_0 = arith.constant 0 : i32
    return %arg0, %c0_i32 : i32, i32
  }
  func.func @transform_1(%arg0: i32) -> (i32, i32) {
    %c0_i32 = arith.constant 0 : i32
    %c0_i32_0 = arith.constant 0 : i32
    %c0_i32_1 = arith.constant 0 : i32
    return %c0_i32, %c0_i32_0 : i32, i32
  }
  func.func @transform_2(%arg0: i32) -> (i32, i32) {
    %c0_i32 = arith.constant 0 : i32
    %c0_i32_0 = arith.constant 0 : i32
    %c0_i32_1 = arith.constant 0 : i32
    return %c0_i32, %c0_i32_0 : i32, i32
  }
  func.func @transform_3(%arg0: i32) -> (i32, i32) {
    %c0_i32 = arith.constant 0 : i32
    %c0_i32_0 = arith.constant 0 : i32
    %c0_i32_1 = arith.constant 0 : i32
    return %c0_i32, %c0_i32_0 : i32, i32
  }
  func.func @transform_4(%arg0: i32) -> (i32, i32) {
    %c0_i32 = arith.constant 0 : i32
    %c0_i32_0 = arith.constant 0 : i32
    %c0_i32_1 = arith.constant 0 : i32
    return %c0_i32, %c0_i32_0 : i32, i32
  }
  func.func @transform_5(%arg0: i32) -> (i32, i32) {
    %c0_i32 = arith.constant 0 : i32
    %c0_i32_0 = arith.constant 0 : i32
    %c0_i32_1 = arith.constant 0 : i32
    return %c0_i32, %c0_i32_0 : i32, i32
  }
  func.func @transform_6(%arg0: i32) -> (i32, i32) {
    %c0_i32 = arith.constant 0 : i32
    %c0_i32_0 = arith.constant 0 : i32
    %c0_i32_1 = arith.constant 0 : i32
    return %c0_i32, %c0_i32_0 : i32, i32
  }
  func.func @transform_7(%arg0: i32) -> (i32, i32) {
    %c0_i32 = arith.constant 0 : i32
    %c0_i32_0 = arith.constant 0 : i32
    return %arg0, %c0_i32 : i32, i32
  }
}

</mosaic_0001>

<llo_original>
// kernel: tpu_custom_call.1
$region0: #{tpu_custom_call.1}
  #allocation0 [shape = 'u32[]', space=smem, size = 0x4, offset = 0x4, fixed_abs, tag = 'smem constant byte address 0x4 - core index']
  #allocation1 [shape = 'u32[144,128]{1,0:T(1,128)}', space=vmem, size = 0x12000, scoped, tag = 'internal scratch']
  %s0 = inlined_call_operand.vmem [shape: f32[128,2], index: 0, kind: input, shape index: {}]
  %s1 = inlined_call_operand.vmem [shape: f32[2,32], index: 1, kind: input, shape index: {}]
  %s2 = inlined_call_operand.vmem [shape: f32[1,32], index: 2, kind: input, shape index: {}]
  %s3 = inlined_call_operand.vmem [shape: bf16[32,32], index: 3, kind: input, shape index: {}]
  %s4 = inlined_call_operand.vmem [shape: f32[32,1], index: 4, kind: input, shape index: {}]
  %s5 = inlined_call_operand.vmem [shape: bf16[32,32], index: 5, kind: input, shape index: {}]
  %s6 = inlined_call_operand.vmem [shape: f32[32,1], index: 6, kind: input, shape index: {}]
  %s7 = inlined_call_operand.vmem [shape: f32[128,32], index: 7, kind: output, shape index: {}]
  %s8 = sld [smem:[#allocation0]]
  $region38: #{tpu_custom_call.1} parent=0
    _
  %s10 = ssub.s32 1, %s8
  %s11 = scalar_select 0, %s10, %s8
  // Predicated region
  $region2: #{tpu_custom_call.1} parent=0 // pred_check
    _
  $region3: #{tpu_custom_call.1} parent=0 // pred_check_branch
    %13 = sbr.rel (0) target = $region5
  $region4: #{tpu_custom_call.1} parent=0 // pred_region
    _
  $region5: #{tpu_custom_call.1} parent=0 // pred_fallthru
    _
  // Predicated region
  $region6: #{tpu_custom_call.1} parent=0 // pred_check
    _
  $region7: #{tpu_custom_call.1} parent=0 // pred_check_branch
    %15 = sbr.rel (0) target = $region9
  $region8: #{tpu_custom_call.1} parent=0 // pred_region
    _
  $region9: #{tpu_custom_call.1} parent=0 // pred_fallthru
    _
  // Predicated region
  $region10: #{tpu_custom_call.1} parent=0 // pred_check
    _
  $region11: #{tpu_custom_call.1} parent=0 // pred_check_branch
    %17 = sbr.rel (0) target = $region13
  $region12: #{tpu_custom_call.1} parent=0 // pred_region
    _
  $region13: #{tpu_custom_call.1} parent=0 // pred_fallthru
    _
  // Predicated region
  $region14: #{tpu_custom_call.1} parent=0 // pred_check
    _
  $region15: #{tpu_custom_call.1} parent=0 // pred_check_branch
    %19 = sbr.rel (0) target = $region17
  $region16: #{tpu_custom_call.1} parent=0 // pred_region
    _
  $region17: #{tpu_custom_call.1} parent=0 // pred_fallthru
    _
  // Predicated region
  $region18: #{tpu_custom_call.1} parent=0 // pred_check
    _
  $region19: #{tpu_custom_call.1} parent=0 // pred_check_branch
    %21 = sbr.rel (0) target = $region21
  $region20: #{tpu_custom_call.1} parent=0 // pred_region
    _
  $region21: #{tpu_custom_call.1} parent=0 // pred_fallthru
    _
  // Predicated region
  $region22: #{tpu_custom_call.1} parent=0 // pred_check
    _
  $region23: #{tpu_custom_call.1} parent=0 // pred_check_branch
    %23 = sbr.rel (0) target = $region25
  $region24: #{tpu_custom_call.1} parent=0 // pred_region
    _
  $region25: #{tpu_custom_call.1} parent=0 // pred_fallthru
    _
  // Predicated region
  $region26: #{tpu_custom_call.1} parent=0 // pred_check
    _
  $region27: #{tpu_custom_call.1} parent=0 // pred_check_branch
    %25 = sbr.rel (0) target = $region29
  $region28: #{tpu_custom_call.1} parent=0 // pred_region
    _
  $region29: #{tpu_custom_call.1} parent=0 // pred_fallthru
    _
  %v27 = vld [vmem:[%s0] sm:$0xff]
  %v28 = vld [vmem:[%s0 + $0x8] sm:$0xff]
  %v29 = vld [vmem:[%s0 + $0x10] sm:$0xff]
  %v30 = vld [vmem:[%s0 + $0x18] sm:$0xff]
  %v31 = vld [vmem:[%s0 + $0x20] sm:$0xff]
  %v32 = vld [vmem:[%s0 + $0x28] sm:$0xff]
  %v33 = vld [vmem:[%s0 + $0x30] sm:$0xff]
  %v34 = vld [vmem:[%s0 + $0x38] sm:$0xff]
  %v35 = vld [vmem:[%s0 + $0x40] sm:$0xff]
  %v36 = vld [vmem:[%s0 + $0x48] sm:$0xff]
  %v37 = vld [vmem:[%s0 + $0x50] sm:$0xff]
  %v38 = vld [vmem:[%s0 + $0x58] sm:$0xff]
  %v39 = vld [vmem:[%s0 + $0x60] sm:$0xff]
  %v40 = vld [vmem:[%s0 + $0x68] sm:$0xff]
  %v41 = vld [vmem:[%s0 + $0x70] sm:$0xff]
  %v42 = vld [vmem:[%s0 + $0x78] sm:$0xff]
  %v43 = vld [vmem:[%s1] sm:$0x3]
  %v44 = vld [vmem:[%s2] sm:$0x1]
  %v46 = vlaneseq
  %v47 = vshrl.u32 %v46, 7
  %v48 = vsub.s32 0, %v47
  %v49 = vrot.slane %v44, %v48
  %52 = vset.pattern.permute.xlu0 0
  %53 = vperm.xlu0 %52, %v27
  %v54 = vpop.permute.xlu0 %53
  %57 = vset.pattern.permute.xlu0 0
  %58 = vperm.xlu0 %57, %v28
  %v59 = vpop.permute.xlu0 %58
  %62 = vset.pattern.permute.xlu0 0
  %63 = vperm.xlu0 %62, %v29
  %v64 = vpop.permute.xlu0 %63
  %67 = vset.pattern.permute.xlu0 0
  %68 = vperm.xlu0 %67, %v30
  %v69 = vpop.permute.xlu0 %68
  %72 = vset.pattern.permute.xlu0 0
  %73 = vperm.xlu0 %72, %v31
  %v74 = vpop.permute.xlu0 %73
  %77 = vset.pattern.permute.xlu0 0
  %78 = vperm.xlu0 %77, %v32
  %v79 = vpop.permute.xlu0 %78
  %82 = vset.pattern.permute.xlu0 0
  %83 = vperm.xlu0 %82, %v33
  %v84 = vpop.permute.xlu0 %83
  %87 = vset.pattern.permute.xlu0 0
  %88 = vperm.xlu0 %87, %v34
  %v89 = vpop.permute.xlu0 %88
  %92 = vset.pattern.permute.xlu0 0
  %93 = vperm.xlu0 %92, %v35
  %v94 = vpop.permute.xlu0 %93
  %97 = vset.pattern.permute.xlu0 0
  %98 = vperm.xlu0 %97, %v36
  %v99 = vpop.permute.xlu0 %98
  %102 = vset.pattern.permute.xlu0 0
  %103 = vperm.xlu0 %102, %v37
  %v104 = vpop.permute.xlu0 %103
  %107 = vset.pattern.permute.xlu0 0
  %108 = vperm.xlu0 %107, %v38
  %v109 = vpop.permute.xlu0 %108
  %112 = vset.pattern.permute.xlu0 0
  %113 = vperm.xlu0 %112, %v39
  %v114 = vpop.permute.xlu0 %113
  %117 = vset.pattern.permute.xlu0 0
  %118 = vperm.xlu0 %117, %v40
  %v119 = vpop.permute.xlu0 %118
  %122 = vset.pattern.permute.xlu0 0
  %123 = vperm.xlu0 %122, %v41
  %v124 = vpop.permute.xlu0 %123
  %127 = vset.pattern.permute.xlu0 0
  %128 = vperm.xlu0 %127, %v42
  %v129 = vpop.permute.xlu0 %128
  %v131 = vlaneseq
  %v132 = vshrl.u32 %v131, 7
  %v133 = vsub.s32 0, %v132
  %v134 = vrot.slane %v43, %v133
  %v135 = vmul.f32 %v54, %v134
  %v136 = vmul.f32 %v59, %v134
  %v137 = vmul.f32 %v64, %v134
  %v138 = vmul.f32 %v69, %v134
  %v139 = vmul.f32 %v74, %v134
  %v140 = vmul.f32 %v79, %v134
  %v141 = vmul.f32 %v84, %v134
  %v142 = vmul.f32 %v89, %v134
  %v143 = vmul.f32 %v94, %v134
  %v144 = vmul.f32 %v99, %v134
  %v145 = vmul.f32 %v104, %v134
  %v146 = vmul.f32 %v109, %v134
  %v147 = vmul.f32 %v114, %v134
  %v148 = vmul.f32 %v119, %v134
  %v149 = vmul.f32 %v124, %v134
  %v150 = vmul.f32 %v129, %v134
  %v151 = vadd.f32 %v49, %v135
  %v152 = vadd.f32 %v49, %v136
  %v153 = vadd.f32 %v49, %v137
  %v154 = vadd.f32 %v49, %v138
  %v155 = vadd.f32 %v49, %v139
  %v156 = vadd.f32 %v49, %v140
  %v157 = vadd.f32 %v49, %v141
  %v158 = vadd.f32 %v49, %v142
  %v159 = vadd.f32 %v49, %v143
  %v160 = vadd.f32 %v49, %v144
  %v161 = vadd.f32 %v49, %v145
  %v162 = vadd.f32 %v49, %v146
  %v163 = vadd.f32 %v49, %v147
  %v164 = vadd.f32 %v49, %v148
  %v165 = vadd.f32 %v49, %v149
  %v166 = vadd.f32 %v49, %v150
  %167 = vset.pattern.permute.xlu0 1
  %168 = vperm.xlu0 %167, %v27
  %v169 = vpop.permute.xlu0 %168
  %171 = vset.pattern.permute.xlu0 1
  %172 = vperm.xlu0 %171, %v28
  %v173 = vpop.permute.xlu0 %172
  %175 = vset.pattern.permute.xlu0 1
  %176 = vperm.xlu0 %175, %v29
  %v177 = vpop.permute.xlu0 %176
  %179 = vset.pattern.permute.xlu0 1
  %180 = vperm.xlu0 %179, %v30
  %v181 = vpop.permute.xlu0 %180
  %183 = vset.pattern.permute.xlu0 1
  %184 = vperm.xlu0 %183, %v31
  %v185 = vpop.permute.xlu0 %184
  %187 = vset.pattern.permute.xlu0 1
  %188 = vperm.xlu0 %187, %v32
  %v189 = vpop.permute.xlu0 %188
  %191 = vset.pattern.permute.xlu0 1
  %192 = vperm.xlu0 %191, %v33
  %v193 = vpop.permute.xlu0 %192
  %195 = vset.pattern.permute.xlu0 1
  %196 = vperm.xlu0 %195, %v34
  %v197 = vpop.permute.xlu0 %196
  %199 = vset.pattern.permute.xlu0 1
  %200 = vperm.xlu0 %199, %v35
  %v201 = vpop.permute.xlu0 %200
  %203 = vset.pattern.permute.xlu0 1
  %204 = vperm.xlu0 %203, %v36
  %v205 = vpop.permute.xlu0 %204
  %207 = vset.pattern.permute.xlu0 1
  %208 = vperm.xlu0 %207, %v37
  %v209 = vpop.permute.xlu0 %208
  %211 = vset.pattern.permute.xlu0 1
  %212 = vperm.xlu0 %211, %v38
  %v213 = vpop.permute.xlu0 %212
  %215 = vset.pattern.permute.xlu0 1
  %216 = vperm.xlu0 %215, %v39
  %v217 = vpop.permute.xlu0 %216
  %219 = vset.pattern.permute.xlu0 1
  %220 = vperm.xlu0 %219, %v40
  %v221 = vpop.permute.xlu0 %220
  %223 = vset.pattern.permute.xlu0 1
  %224 = vperm.xlu0 %223, %v41
  %v225 = vpop.permute.xlu0 %224
  %227 = vset.pattern.permute.xlu0 1
  %228 = vperm.xlu0 %227, %v42
  %v229 = vpop.permute.xlu0 %228
  %v231 = vlaneseq
  %v232 = vshrl.u32 %v231, 7
  %v233 = vsub.s32 1, %v232
  %v234 = vrot.slane %v43, %v233
  %v235 = vmul.f32 %v169, %v234
  %v236 = vmul.f32 %v173, %v234
  %v237 = vmul.f32 %v177, %v234
  %v238 = vmul.f32 %v181, %v234
  %v239 = vmul.f32 %v185, %v234
  %v240 = vmul.f32 %v189, %v234
  %v241 = vmul.f32 %v193, %v234
  %v242 = vmul.f32 %v197, %v234
  %v243 = vmul.f32 %v201, %v234
  %v244 = vmul.f32 %v205, %v234
  %v245 = vmul.f32 %v209, %v234
  %v246 = vmul.f32 %v213, %v234
  %v247 = vmul.f32 %v217, %v234
  %v248 = vmul.f32 %v221, %v234
  %v249 = vmul.f32 %v225, %v234
  %v250 = vmul.f32 %v229, %v234
  %v251 = vadd.f32 %v151, %v235
  %v252 = vadd.f32 %v152, %v236
  %v253 = vadd.f32 %v153, %v237
  %v254 = vadd.f32 %v154, %v238
  %v255 = vadd.f32 %v155, %v239
  %v256 = vadd.f32 %v156, %v240
  %v257 = vadd.f32 %v157, %v241
  %v258 = vadd.f32 %v158, %v242
  %v259 = vadd.f32 %v159, %v243
  %v260 = vadd.f32 %v160, %v244
  %v261 = vadd.f32 %v161, %v245
  %v262 = vadd.f32 %v162, %v246
  %v263 = vadd.f32 %v163, %v247
  %v264 = vadd.f32 %v164, %v248
  %v265 = vadd.f32 %v165, %v249
  %v266 = vadd.f32 %v166, %v250
  %v267 = vtanh.pop %v251
  %v268 = vtanh.pop %v252
  %v269 = vtanh.pop %v253
  %v270 = vtanh.pop %v254
  %v271 = vtanh.pop %v255
  %v272 = vtanh.pop %v256
  %v273 = vtanh.pop %v257
  %v274 = vtanh.pop %v258
  %v275 = vtanh.pop %v259
  %v276 = vtanh.pop %v260
  %v277 = vtanh.pop %v261
  %v278 = vtanh.pop %v262
  %v279 = vtanh.pop %v263
  %v280 = vtanh.pop %v264
  %v281 = vtanh.pop %v265
  %v282 = vtanh.pop %v266
  %283 = vxpose.xlu0.b32.start [1/16] %v267, 128
  %284 = vxpose.xlu0.b32.cont [2/16] %v268, 128
  %285 = vxpose.xlu0.b32.cont [3/16] %v269, 128
  %286 = vxpose.xlu0.b32.cont [4/16] %v270, 128
  %287 = vxpose.xlu0.b32.cont [5/16] %v271, 128
  %288 = vxpose.xlu0.b32.cont [6/16] %v272, 128
  %289 = vxpose.xlu0.b32.cont [7/16] %v273, 128
  %290 = vxpose.xlu0.b32.cont [8/16] %v274, 128
  %291 = vxpose.xlu0.b32.cont [9/16] %v275, 128
  %292 = vxpose.xlu0.b32.cont [10/16] %v276, 128
  %293 = vxpose.xlu0.b32.cont [11/16] %v277, 128
  %294 = vxpose.xlu0.b32.cont [12/16] %v278, 128
  %295 = vxpose.xlu0.b32.cont [13/16] %v279, 128
  %296 = vxpose.xlu0.b32.cont [14/16] %v280, 128
  %297 = vxpose.xlu0.b32.cont [15/16] %v281, 128
  %298 = vxpose.xlu0.b32.end [16/16] %v282, 128
  %v299 = vpop.trf.xlu0
  %v300 = vpop.trf.xlu0
  %v301 = vpop.trf.xlu0
  %v302 = vpop.trf.xlu0
  %v303 = vpop.trf.xlu0
  %v304 = vpop.trf.xlu0
  %v305 = vpop.trf.xlu0
  %v306 = vpop.trf.xlu0
  %v307 = vpop.trf.xlu0
  %v308 = vpop.trf.xlu0
  %v309 = vpop.trf.xlu0
  %v310 = vpop.trf.xlu0
  %v311 = vpop.trf.xlu0
  %v312 = vpop.trf.xlu0
  %v313 = vpop.trf.xlu0
  %v314 = vpop.trf.xlu0
  %v315 = vld [vmem:[%s3] sm:$0xf]
  %v316 = vld [vmem:[%s3 + $0x4] sm:$0xf]
  %v317 = vld [vmem:[%s3 + $0x8] sm:$0xf]
  %v318 = vld [vmem:[%s3 + $0xc] sm:$0xf]
  %v319 = vpack.c.bf16 %v300, %v299
  %v320 = vpack.c.bf16 %v302, %v301
  %v321 = vld [vmem:[%s4] sm:$0xff]
  %v322 = vld [vmem:[%s4 + $0x8] sm:$0xff]
  %v323 = vld [vmem:[%s4 + $0x10] sm:$0xff]
  %v324 = vld [vmem:[%s4 + $0x18] sm:$0xff]
  %326 = vset.pattern.permute.xlu0 0
  %327 = vperm.xlu0 %326, %v321
  %v328 = vpop.permute.xlu0 %327
  %331 = vset.pattern.permute.xlu0 0
  %332 = vperm.xlu0 %331, %v322
  %v333 = vpop.permute.xlu0 %332
  %336 = vset.pattern.permute.xlu0 0
  %337 = vperm.xlu0 %336, %v323
  %v338 = vpop.permute.xlu0 %337
  %341 = vset.pattern.permute.xlu0 0
  %342 = vperm.xlu0 %341, %v324
  %v343 = vpop.permute.xlu0 %342
  %v349 = vunpack.c.l.b16 %v315
  %v350 = vunpack.c.l.b16 %v316
  %v351 = vunpack.c.l.b16 %v317
  %v352 = vunpack.c.l.b16 %v318
  %v353 = vpack.c.b16 %v350, %v349
  %v354 = vpack.c.b16 %v352, %v351
  %vm355 = vcmask 261120
  %v357 = vsel %vm355, %v353, 0
  %v360 = vsel %vm355, %v354, 0
  %362 = vmatprep.subr.bf16.mxu0 0
  %363 = vmatpush1.bf16.msra.mxu0 %v319
  %364 = vmatprep.subr.bf16.mxu0 0
  %365 = vmatpush1.bf16.msra.mxu0 %v320
  %366 = vmatprep.subr.bf16.mxu0 0
  %367 = vmatpush1.bf16.msra.mxu0 0
  %368 = vmatprep.subr.bf16.mxu0 0
  %369 = vmatpush1.bf16.msra.mxu0 0
  %370 = vmatprep.subr.bf16.mxu0 0
  %371 = vmatpush1.bf16.msra.mxu0 0
  %372 = vmatprep.subr.bf16.mxu0 0
  %373 = vmatpush1.bf16.msra.mxu0 0
  %374 = vmatprep.subr.bf16.mxu0 0
  %375 = vmatpush1.bf16.msra.mxu0 0
  %376 = vmatprep.subr.bf16.mxu0 0
  %377 = vmatpush1.bf16.msra.mxu0 0
  %378 = vmatprep.subr.bf16.mxu0 0
  %379 = vmatpush1.bf16.msra.mxu0 0
  %380 = vmatprep.subr.bf16.mxu0 0
  %381 = vmatpush1.bf16.msra.mxu0 0
  %382 = vmatprep.subr.bf16.mxu0 0
  %383 = vmatpush1.bf16.msra.mxu0 0
  %384 = vmatprep.subr.bf16.mxu0 0
  %385 = vmatpush1.bf16.msra.mxu0 0
  %386 = vmatprep.subr.bf16.mxu0 0
  %387 = vmatpush1.bf16.msra.mxu0 0
  %388 = vmatprep.subr.bf16.mxu0 0
  %389 = vmatpush1.bf16.msra.mxu0 0
  %390 = vmatprep.subr.bf16.mxu0 0
  %391 = vmatpush1.bf16.msra.mxu0 0
  %392 = vmatprep.subr.bf16.mxu0 0
  %393 = vmatpush1.bf16.msra.mxu0 0
  %394 = vmatprep.mubr.bf16.mxu0 0
  %395 = vmatmul.mubr.bf16.gmra.mrb[0].mxu0 %v357
  %v396 = vpop.f32.mrb[0].mxu0
  %v397 = vadd.f32 %v328, %v396
  %v398 = vpop.f32.mrb[0].mxu0
  %v399 = vpop.f32.mrb[0].mxu0
  %v400 = vadd.f32 %v333, %v399
  %v401 = vpop.f32.mrb[0].mxu0
  %402 = vmatprep.mubr.bf16.mxu0 0
  %403 = vmatmul.mubr.bf16.gmra.mrb[0].mxu0 %v360
  %v404 = vpop.f32.mrb[0].mxu0
  %v405 = vadd.f32 %v338, %v404
  %v406 = vpop.f32.mrb[0].mxu0
  %v407 = vpop.f32.mrb[0].mxu0
  %v408 = vadd.f32 %v343, %v407
  %v409 = vpop.f32.mrb[0].mxu0
  %410 = vdwg.mxu0
  %v411 = vtanh.pop %v397
  %v412 = vtanh.pop %v400
  %v413 = vtanh.pop %v405
  %v414 = vtanh.pop %v408
  %v415 = vld [vmem:[%s5] sm:$0xf]
  %v416 = vld [vmem:[%s5 + $0x4] sm:$0xf]
  %v417 = vld [vmem:[%s5 + $0x8] sm:$0xf]
  %v418 = vld [vmem:[%s5 + $0xc] sm:$0xf]
  %v419 = vpack.c.bf16 %v412, %v411
  %v420 = vpack.c.bf16 %v414, %v413
  %v421 = vld [vmem:[%s6] sm:$0xff]
  %v422 = vld [vmem:[%s6 + $0x8] sm:$0xff]
  %v423 = vld [vmem:[%s6 + $0x10] sm:$0xff]
  %v424 = vld [vmem:[%s6 + $0x18] sm:$0xff]
  %426 = vset.pattern.permute.xlu0 0
  %427 = vperm.xlu0 %426, %v421
  %v428 = vpop.permute.xlu0 %427
  %431 = vset.pattern.permute.xlu0 0
  %432 = vperm.xlu0 %431, %v422
  %v433 = vpop.permute.xlu0 %432
  %436 = vset.pattern.permute.xlu0 0
  %437 = vperm.xlu0 %436, %v423
  %v438 = vpop.permute.xlu0 %437
  %441 = vset.pattern.permute.xlu0 0
  %442 = vperm.xlu0 %441, %v424
  %v443 = vpop.permute.xlu0 %442
  %v449 = vunpack.c.l.b16 %v415
  %v450 = vunpack.c.l.b16 %v416
  %v451 = vunpack.c.l.b16 %v417
  %v452 = vunpack.c.l.b16 %v418
  %v453 = vpack.c.b16 %v450, %v449
  %v454 = vpack.c.b16 %v452, %v451
  %v456 = vsel %vm355, %v453, 0
  %v459 = vsel %vm355, %v454, 0
  %461 = vmatprep.subr.bf16.mxu0 0
  %462 = vmatpush1.bf16.msra.mxu0 %v419
  %463 = vmatprep.subr.bf16.mxu0 0
  %464 = vmatpush1.bf16.msra.mxu0 %v420
  %465 = vmatprep.subr.bf16.mxu0 0
  %466 = vmatpush1.bf16.msra.mxu0 0
  %467 = vmatprep.subr.bf16.mxu0 0
  %468 = vmatpush1.bf16.msra.mxu0 0
  %469 = vmatprep.subr.bf16.mxu0 0
  %470 = vmatpush1.bf16.msra.mxu0 0
  %471 = vmatprep.subr.bf16.mxu0 0
  %472 = vmatpush1.bf16.msra.mxu0 0
  %473 = vmatprep.subr.bf16.mxu0 0
  %474 = vmatpush1.bf16.msra.mxu0 0
  %475 = vmatprep.subr.bf16.mxu0 0
  %476 = vmatpush1.bf16.msra.mxu0 0
  %477 = vmatprep.subr.bf16.mxu0 0
  %478 = vmatpush1.bf16.msra.mxu0 0
  %479 = vmatprep.subr.bf16.mxu0 0
  %480 = vmatpush1.bf16.msra.mxu0 0
  %481 = vmatprep.subr.bf16.mxu0 0
  %482 = vmatpush1.bf16.msra.mxu0 0
  %483 = vmatprep.subr.bf16.mxu0 0
  %484 = vmatpush1.bf16.msra.mxu0 0
  %485 = vmatprep.subr.bf16.mxu0 0
  %486 = vmatpush1.bf16.msra.mxu0 0
  %487 = vmatprep.subr.bf16.mxu0 0
  %488 = vmatpush1.bf16.msra.mxu0 0
  %489 = vmatprep.subr.bf16.mxu0 0
  %490 = vmatpush1.bf16.msra.mxu0 0
  %491 = vmatprep.subr.bf16.mxu0 0
  %492 = vmatpush1.bf16.msra.mxu0 0
  %493 = vmatprep.mubr.bf16.mxu0 0
  %494 = vmatmul.mubr.bf16.gmra.mrb[0].mxu0 %v456
  %v495 = vpop.f32.mrb[0].mxu0
  %v496 = vadd.f32 %v428, %v495
  %v497 = vpop.f32.mrb[0].mxu0
  %v498 = vpop.f32.mrb[0].mxu0
  %v499 = vadd.f32 %v433, %v498
  %v500 = vpop.f32.mrb[0].mxu0
  %501 = vmatprep.mubr.bf16.mxu0 0
  %502 = vmatmul.mubr.bf16.gmra.mrb[0].mxu0 %v459
  %v503 = vpop.f32.mrb[0].mxu0
  %v504 = vadd.f32 %v438, %v503
  %v505 = vpop.f32.mrb[0].mxu0
  %v506 = vpop.f32.mrb[0].mxu0
  %v507 = vadd.f32 %v443, %v506
  %v508 = vpop.f32.mrb[0].mxu0
  %509 = vdwg.mxu0
  %510 = vxpose.xlu0.b32.start [1/16] %v496, 128
  %511 = vxpose.xlu0.b32.cont [2/16] %v499, 128
  %512 = vxpose.xlu0.b32.cont [3/16] %v504, 128
  %513 = vxpose.xlu0.b32.cont [4/16] %v507, 128
  %514 = vxpose.xlu0.b32.cont [5/16] 0.0, 128
  %515 = vxpose.xlu0.b32.cont [6/16] 0.0, 128
  %516 = vxpose.xlu0.b32.cont [7/16] 0.0, 128
  %517 = vxpose.xlu0.b32.cont [8/16] 0.0, 128
  %518 = vxpose.xlu0.b32.cont [9/16] 0.0, 128
  %519 = vxpose.xlu0.b32.cont [10/16] 0.0, 128
  %520 = vxpose.xlu0.b32.cont [11/16] 0.0, 128
  %521 = vxpose.xlu0.b32.cont [12/16] 0.0, 128
  %522 = vxpose.xlu0.b32.cont [13/16] 0.0, 128
  %523 = vxpose.xlu0.b32.cont [14/16] 0.0, 128
  %524 = vxpose.xlu0.b32.cont [15/16] 0.0, 128
  %525 = vxpose.xlu0.b32.end [16/16] 0.0, 128
  %v526 = vpop.trf.xlu0
  %v527 = vpop.trf.xlu0
  %v528 = vpop.trf.xlu0
  %v529 = vpop.trf.xlu0
  %v530 = vpop.trf.xlu0
  %v531 = vpop.trf.xlu0
  %v532 = vpop.trf.xlu0
  %v533 = vpop.trf.xlu0
  %v534 = vpop.trf.xlu0
  %v535 = vpop.trf.xlu0
  %v536 = vpop.trf.xlu0
  %v537 = vpop.trf.xlu0
  %v538 = vpop.trf.xlu0
  %v539 = vpop.trf.xlu0
  %v540 = vpop.trf.xlu0
  %v541 = vpop.trf.xlu0
  %542 = vst.msk [vmem:[%s7] sm:$0xff] %vm355, %v526
  %543 = vst.msk [vmem:[%s7 + $0x8] sm:$0xff] %vm355, %v527
  %544 = vst.msk [vmem:[%s7 + $0x10] sm:$0xff] %vm355, %v528
  %545 = vst.msk [vmem:[%s7 + $0x18] sm:$0xff] %vm355, %v529
  %546 = vst.msk [vmem:[%s7 + $0x20] sm:$0xff] %vm355, %v530
  %547 = vst.msk [vmem:[%s7 + $0x28] sm:$0xff] %vm355, %v531
  %548 = vst.msk [vmem:[%s7 + $0x30] sm:$0xff] %vm355, %v532
  %549 = vst.msk [vmem:[%s7 + $0x38] sm:$0xff] %vm355, %v533
  %550 = vst.msk [vmem:[%s7 + $0x40] sm:$0xff] %vm355, %v534
  %551 = vst.msk [vmem:[%s7 + $0x48] sm:$0xff] %vm355, %v535
  %552 = vst.msk [vmem:[%s7 + $0x50] sm:$0xff] %vm355, %v536
  %553 = vst.msk [vmem:[%s7 + $0x58] sm:$0xff] %vm355, %v537
  %554 = vst.msk [vmem:[%s7 + $0x60] sm:$0xff] %vm355, %v538
  %555 = vst.msk [vmem:[%s7 + $0x68] sm:$0xff] %vm355, %v539
  %556 = vst.msk [vmem:[%s7 + $0x70] sm:$0xff] %vm355, %v540
  %557 = vst.msk [vmem:[%s7 + $0x78] sm:$0xff] %vm355, %v541
  // Predicated region
  $region30: #{tpu_custom_call.1} parent=0 // pred_check
    _
  $region31: #{tpu_custom_call.1} parent=0 // pred_check_branch
    %559 = sbr.rel (0) target = $region33
  $region32: #{tpu_custom_call.1} parent=0 // pred_region
    _
  $region33: #{tpu_custom_call.1} parent=0 // pred_fallthru
    _
  // Predicated region
  $region34: #{tpu_custom_call.1} parent=0 // pred_check
    _
  $region35: #{tpu_custom_call.1} parent=0 // pred_check_branch
    %561 = sbr.rel (0) target = $region37
  $region36: #{tpu_custom_call.1} parent=0 // pred_region
    _
  $region37: #{tpu_custom_call.1} parent=0 // pred_fallthru
    _

</llo_original>
